<compile_context>
chip_gen: v7x
topology: tpu7x:2x2x1
jax: 0.10.0
libtpu: 0.0.40
codegen_flags: <defaults>
</compile_context>

<pallas_src>
import functools

import jax
import jax.numpy as jnp
from jax.experimental import pallas as pl
from jax.experimental.pallas import tpu as pltpu

LANES = 128                   # TPU lane width (vreg minor dim)
W2_ROW0 = 8                   # sublane-tile-aligned start row of the w2 slab
PACK_ROWS = W2_ROW0 + LANES   # 136 rows: [w1|b1|b2|pad] tile + (128,128) w2 slab


def pack_params(w1, b1, w2, b2):
    """Pack (w1, b1, w2, b2) into one lane-dense (136, 128) f32 buffer.

    Layout (all unused entries are exact zeros):
      rows [0, in_dim)          cols [0, hidden)  : w1   (in_dim, hidden)
      row  in_dim               cols [0, hidden)  : b1
      row  in_dim + 1           cols [0, out_dim) : b2
      rows [8, 8 + hidden)      cols [0, out_dim) : w2   (hidden, out_dim)
      rows [8 + hidden, 136)                      : zeros (w2 slab padding)
    """
    in_dim, hidden = w1.shape
    hidden2, out_dim = w2.shape
    assert hidden2 == hidden, "w1/w2 hidden dims must match"
    # Layout assumptions -- silently wrong results otherwise (per perf review).
    assert in_dim + 2 <= W2_ROW0, "w1 rows + b1 + b2 must fit in the first sublane tile"
    assert hidden <= LANES, "hidden must fit in one 128-lane row"
    assert out_dim <= LANES, "out_dim must fit in one 128-lane row"

    p = jnp.zeros((PACK_ROWS, LANES), jnp.float32)
    p = p.at[0:in_dim, 0:hidden].set(w1.astype(jnp.float32))
    p = p.at[in_dim, 0:hidden].set(b1.reshape(hidden).astype(jnp.float32))
    p = p.at[in_dim + 1, 0:out_dim].set(b2.reshape(out_dim).astype(jnp.float32))
    p = p.at[W2_ROW0:W2_ROW0 + hidden, 0:out_dim].set(w2.astype(jnp.float32))
    return p


def _make_mlp_kernel(in_dim, hidden, out_dim):
    b1_row = in_dim
    b2_row = in_dim + 1

    def kernel(x_ref, p_ref, o_ref):
        x = x_ref[...]                                             # (B, in_dim)

        # Layer 1 on the MXU over all 128 lanes.  Lanes >= hidden of w1/b1 are
        # exact zeros, so those lanes of h stay exactly 0 after the relu.
        h = jnp.dot(x, p_ref[0:in_dim, :], preferred_element_type=jnp.float32)
        h = jnp.maximum(h + p_ref[b1_row:b1_row + 1, :], 0.0)      # (B, 128)

        # Layer 2 on the MXU against the zero-padded (128, 128) w2 slab.
        # Rows >= hidden of the slab are zero (and h's padding lanes are zero),
        # so contracting over all 128 lanes is exact.
        y = jnp.dot(h, p_ref[W2_ROW0:W2_ROW0 + LANES, :],
                    preferred_element_type=jnp.float32)            # (B, 128)
        y = y + p_ref[b2_row:b2_row + 1, :]

        # Emit the real (B, out_dim) result directly: one masked vst, no
        # post-kernel slice / extra HBM round trip.
        o_ref[...] = jnp.maximum(y[:, :out_dim], 0.0)

    return kernel


@functools.partial(jax.jit, static_argnames=("in_dim", "hidden", "out_dim"))
def my_model_forward(x, packed, *, in_dim=3, hidden=8, out_dim=4):
    """x: (B, in_dim) f32, packed: (136, 128) f32.  Returns (B, out_dim) f32."""
    batch = x.shape[0]
    assert packed.shape == (PACK_ROWS, LANES)
    vmem = pl.BlockSpec(memory_space=pltpu.MemorySpace.VMEM)

    flops = 2 * batch * (in_dim * hidden + hidden * out_dim)
    bytes_accessed = 4 * (batch * in_dim + PACK_ROWS * LANES + batch * out_dim)

    return pl.pallas_call(
        _make_mlp_kernel(in_dim, hidden, out_dim),
        out_shape=jax.ShapeDtypeStruct((batch, out_dim), jnp.float32),
        in_specs=[vmem, vmem],
        out_specs=vmem,
        cost_estimate=pl.CostEstimate(flops=flops, transcendentals=0,
                                      bytes_accessed=bytes_accessed),
    )(x, packed)


def init_params(key, in_dim=3, hidden=8, out_dim=4):
    """Deterministic init mimicking torch.nn.Linear's U(-1/sqrt(fan_in), ...)."""
    k1, k2, k3, k4 = jax.random.split(key, 4)
    s1 = 1.0 / jnp.sqrt(in_dim)
    s2 = 1.0 / jnp.sqrt(hidden)
    w1 = jax.random.uniform(k1, (in_dim, hidden), jnp.float32, -s1, s1)
    b1 = jax.random.uniform(k2, (1, hidden), jnp.float32, -s1, s1)
    w2 = jax.random.uniform(k3, (hidden, out_dim), jnp.float32, -s2, s2)
    b2 = jax.random.uniform(k4, (1, out_dim), jnp.float32, -s2, s2)
    return w1, b1, w2, b2


if __name__ == "__main__":
    key = jax.random.PRNGKey(0)
    k_params, k_x = jax.random.split(key)

    in_dim, hidden, out_dim, batch = 3, 8, 4, 8
    w1, b1, w2, b2 = init_params(k_params, in_dim, hidden, out_dim)
    packed = pack_params(w1, b1, w2, b2)       # one-time host-side packing

    # matches MyModel.get_rand_inputs: uniform [0, 1) of shape (batch, in_dim)
    x = jax.random.uniform(k_x, (batch, in_dim), jnp.float32)

    out = my_model_forward(x, packed, in_dim=in_dim, hidden=hidden,
                           out_dim=out_dim)
    out = jax.block_until_ready(out)

    # sanity check against plain-JAX reference
    ref = jnp.maximum(jnp.maximum(x @ w1 + b1, 0.0) @ w2 + b2, 0.0)
    assert out.shape == (batch, out_dim)
    assert jnp.allclose(out, ref, atol=1e-5, rtol=1e-5)

    print("KERNEL_OK")
</pallas_src>

<mosaic_0001>
module attributes {stable_mosaic.version = 11 : i64} {
  func.func @kernel(%arg0: memref<8x3xf32, #tpu.memory_space<vmem>>, %arg1: memref<136x128xf32, #tpu.memory_space<vmem>>, %arg2: memref<8x4xf32, #tpu.memory_space<vmem>>) attributes {dimension_semantics = [], scalar_prefetch = 0 : i64, scratch_operands = 0 : i64, tpu.core_type = #tpu.core_type<tc>} {
    %c0 = arith.constant 0 : index
    %c0_0 = arith.constant 0 : index
    %0 = vector.load %arg0[%c0, %c0_0] : memref<8x3xf32, #tpu.memory_space<vmem>>, vector<8x3xf32>
    %c0_1 = arith.constant 0 : index
    %c0_2 = arith.constant 0 : index
    %1 = vector.load %arg1[%c0_1, %c0_2] : memref<136x128xf32, #tpu.memory_space<vmem>>, vector<3x128xf32>
    %cst = arith.constant dense<0.000000e+00> : vector<8x128xf32>
    %2 = tpu.matmul %0, %1, %cst {dimension_numbers = #tpu.dot_dimension_numbers<[1], [0], [0], [1], [0, 0, 1, 1], [], []>} : vector<8x3xf32>, vector<3x128xf32>, vector<8x128xf32> -> vector<8x128xf32>
    %c3 = arith.constant 3 : index
    %c0_3 = arith.constant 0 : index
    %3 = vector.load %arg1[%c3, %c0_3] : memref<136x128xf32, #tpu.memory_space<vmem>>, vector<1x128xf32>
    %4 = vector.broadcast %3 : vector<1x128xf32> to vector<8x128xf32>
    %5 = arith.addf %2, %4 : vector<8x128xf32>
    %cst_4 = arith.constant 0.000000e+00 : f32
    %6 = vector.broadcast %cst_4 : f32 to vector<8x128xf32>
    %7 = arith.maximumf %5, %6 : vector<8x128xf32>
    %c8 = arith.constant 8 : index
    %c0_5 = arith.constant 0 : index
    %8 = vector.load %arg1[%c8, %c0_5] : memref<136x128xf32, #tpu.memory_space<vmem>>, vector<128x128xf32>
    %cst_6 = arith.constant dense<0.000000e+00> : vector<8x128xf32>
    %9 = tpu.matmul %7, %8, %cst_6 {dimension_numbers = #tpu.dot_dimension_numbers<[1], [0], [0], [1], [0, 0, 1, 1], [], []>} : vector<8x128xf32>, vector<128x128xf32>, vector<8x128xf32> -> vector<8x128xf32>
    %c4 = arith.constant 4 : index
    %c0_7 = arith.constant 0 : index
    %10 = vector.load %arg1[%c4, %c0_7] : memref<136x128xf32, #tpu.memory_space<vmem>>, vector<1x128xf32>
    %11 = vector.broadcast %10 : vector<1x128xf32> to vector<8x128xf32>
    %12 = arith.addf %9, %11 : vector<8x128xf32>
    %13 = vector.extract_strided_slice %12 {offsets = [0, 0], sizes = [8, 4], strides = [1, 1]} : vector<8x128xf32> to vector<8x4xf32>
    %cst_8 = arith.constant 0.000000e+00 : f32
    %14 = vector.broadcast %cst_8 : f32 to vector<8x4xf32>
    %15 = arith.maximumf %13, %14 : vector<8x4xf32>
    %c0_9 = arith.constant 0 : index
    %c0_10 = arith.constant 0 : index
    %16 = vector.load %arg2[%c0_9, %c0_10] : memref<8x4xf32, #tpu.memory_space<vmem>>, vector<8x4xf32>
    tpu.vector_store %arg2[%c0_9, %c0_10], %15 {strides = array<i32>} : memref<8x4xf32, #tpu.memory_space<vmem>>, vector<8x4xf32>,
    return
  }
}

</mosaic_0001>

<llo_original>
// kernel: my_model_forward.1
$region0: #{my_model_forward.1}
  #allocation0 [shape = 'u32[]', space=smem, size = 0x4, offset = 0x4, fixed_abs, tag = 'smem constant byte address 0x4 - core index']
  #allocation1 [shape = 'u32[144,128]{1,0:T(1,128)}', space=vmem, size = 0x12000, scoped, tag = 'internal scratch']
  %s0 = inlined_call_operand.vmem [shape: f32[8,3], index: 0, kind: input, shape index: {}]
  %s1 = inlined_call_operand.hbm [shape: f32[136,128], index: 1, kind: input, shape index: {}]
  %s2 = inlined_call_operand.vmem [shape: f32[8,4], index: 2, kind: output, shape index: {}]
  %s3 = sld [smem:[#allocation0]]
  $region22: #{my_model_forward.1} parent=0
    _
  %s5 = ssub.s32 1, %s3
  %s6 = scalar_select 0, %s5, %s3
  $region1: #{my_model_forward.1} parent=0
    #allocation2 [shape = 'u8[69632]{0}', space=vmem, size = 0x11000, scoped, tag = 'input window, operand 1, single buffered']
    #allocation3 [shape = 's32[1]{0}', space=sflag, size = 0x4, scoped, tag = 'scoped memory for my_model_forward.1']
    %7 = vsyncpa [#allocation3], 0
    // Predicated region
    $region2: #{my_model_forward.1} parent=1 // pred_check
      _
    $region3: #{my_model_forward.1} parent=1 // pred_check_branch
      %9 = sbr.rel (0) target = $region5
    $region4: #{my_model_forward.1} parent=1 // pred_region
      _
    $region5: #{my_model_forward.1} parent=1 // pred_fallthru
      _
    // Predicated region
    $region6: #{my_model_forward.1} parent=1 // pred_check
      _
    $region7: #{my_model_forward.1} parent=1 // pred_check_branch
      %11 = sbr.rel (0) target = $region9
    $region8: #{my_model_forward.1} parent=1 // pred_region
      %s13 = ssub.s32 2176, 2176
      %14 = vsyncadd [#allocation3], %s13
      %s15 = sshll.u32 [#allocation2], 4
      %s16 = int_to_ptr.vmem [resolvable:$true] %s15
      %21 = dma.hbm_to_vmem [thread:$0]  %s1, 2176, %s16, [#allocation3], 128, 128, 8
    $region9: #{my_model_forward.1} parent=1 // pred_fallthru
      _
    // Predicated region
    $region10: #{my_model_forward.1} parent=1 // pred_check
      _
    $region11: #{my_model_forward.1} parent=1 // pred_check_branch
      %23 = sbr.rel (0) target = $region13
    $region12: #{my_model_forward.1} parent=1 // pred_region
      %24 = dma.done [#allocation3], 2176
    $region13: #{my_model_forward.1} parent=1 // pred_fallthru
      _
    %v25 = vld [vmem:[%s0] sm:$0xff]
    %v26 = vld [vmem:[#allocation2] sm:$0x7]
    %v27 = vld [vmem:[#allocation2 + $0x3] sm:$0x1]
    %v28 = vlaneseq
    %v29 = vshrl.u32 %v28, 7
    %v30 = vsub.s32 0, %v29
    %v31 = vrot.slane %v27, %v30
    %vm32 = vcmask 23552
    %v34 = vsel %vm32, %v25, 0
    %vm36 = vcmask 1042432
    %v38 = vsel %vm36, %v26, 0
    %40 = vmatprep.subr.mxu0 0.0
    %41 = vmatpush1.msra.mxu0 %v38
    %42 = vmatprep.subr.mxu0 0.0
    %43 = vmatpush1.msra.mxu0 0.0
    %44 = vmatprep.subr.mxu0 0.0
    %45 = vmatpush1.msra.mxu0 0.0
    %46 = vmatprep.subr.mxu0 0.0
    %47 = vmatpush1.msra.mxu0 0.0
    %48 = vmatprep.subr.mxu0 0.0
    %49 = vmatpush1.msra.mxu0 0.0
    %50 = vmatprep.subr.mxu0 0.0
    %51 = vmatpush1.msra.mxu0 0.0
    %52 = vmatprep.subr.mxu0 0.0
    %53 = vmatpush1.msra.mxu0 0.0
    %54 = vmatprep.subr.mxu0 0.0
    %55 = vmatpush1.msra.mxu0 0.0
    %56 = vmatprep.subr.mxu0 0.0
    %57 = vmatpush1.msra.mxu0 0.0
    %58 = vmatprep.subr.mxu0 0.0
    %59 = vmatpush1.msra.mxu0 0.0
    %60 = vmatprep.subr.mxu0 0.0
    %61 = vmatpush1.msra.mxu0 0.0
    %62 = vmatprep.subr.mxu0 0.0
    %63 = vmatpush1.msra.mxu0 0.0
    %64 = vmatprep.subr.mxu0 0.0
    %65 = vmatpush1.msra.mxu0 0.0
    %66 = vmatprep.subr.mxu0 0.0
    %67 = vmatpush1.msra.mxu0 0.0
    %68 = vmatprep.subr.mxu0 0.0
    %69 = vmatpush1.msra.mxu0 0.0
    %70 = vmatprep.subr.mxu0 0.0
    %71 = vmatpush1.msra.mxu0 0.0
    %72 = vmatprep.subr.mxu0 0.0
    %73 = vmatpush1.msra.mxu0 0.0
    %74 = vmatprep.subr.mxu0 0.0
    %75 = vmatpush1.msra.mxu0 0.0
    %76 = vmatprep.subr.mxu0 0.0
    %77 = vmatpush1.msra.mxu0 0.0
    %78 = vmatprep.subr.mxu0 0.0
    %79 = vmatpush1.msra.mxu0 0.0
    %80 = vmatprep.subr.mxu0 0.0
    %81 = vmatpush1.msra.mxu0 0.0
    %82 = vmatprep.subr.mxu0 0.0
    %83 = vmatpush1.msra.mxu0 0.0
    %84 = vmatprep.subr.mxu0 0.0
    %85 = vmatpush1.msra.mxu0 0.0
    %86 = vmatprep.subr.mxu0 0.0
    %87 = vmatpush1.msra.mxu0 0.0
    %88 = vmatprep.subr.mxu0 0.0
    %89 = vmatpush1.msra.mxu0 0.0
    %90 = vmatprep.subr.mxu0 0.0
    %91 = vmatpush1.msra.mxu0 0.0
    %92 = vmatprep.subr.mxu0 0.0
    %93 = vmatpush1.msra.mxu0 0.0
    %94 = vmatprep.subr.mxu0 0.0
    %95 = vmatpush1.msra.mxu0 0.0
    %96 = vmatprep.subr.mxu0 0.0
    %97 = vmatpush1.msra.mxu0 0.0
    %98 = vmatprep.subr.mxu0 0.0
    %99 = vmatpush1.msra.mxu0 0.0
    %100 = vmatprep.subr.mxu0 0.0
    %101 = vmatpush1.msra.mxu0 0.0
    %102 = vmatprep.subr.mxu0 0.0
    %103 = vmatpush1.msra.mxu0 0.0
    %104 = vmatprep.mubr.f32.mxu0 0.0
    %105 = vmatmul.mubr.f32.gmra.mrb[0].mxu0 %v34
    %v106 = vpop.f32.mrb[0].mxu0
    %v107 = vadd.f32 %v31, %v106
    %v108 = vpop.f32.mrb[0].mxu0
    %109 = vdwg.mxu0
    %v110 = vmax.f32 %v107, 0.0
    %v111 = vld [vmem:[#allocation2 + $0x8] sm:$0xff]
    %v112 = vld [vmem:[#allocation2 + $0x10] sm:$0xff]
    %v113 = vld [vmem:[#allocation2 + $0x18] sm:$0xff]
    %v114 = vld [vmem:[#allocation2 + $0x20] sm:$0xff]
    %v115 = vld [vmem:[#allocation2 + $0x28] sm:$0xff]
    %v116 = vld [vmem:[#allocation2 + $0x30] sm:$0xff]
    %v117 = vld [vmem:[#allocation2 + $0x38] sm:$0xff]
    %v118 = vld [vmem:[#allocation2 + $0x40] sm:$0xff]
    %v119 = vld [vmem:[#allocation2 + $0x48] sm:$0xff]
    %v120 = vld [vmem:[#allocation2 + $0x50] sm:$0xff]
    %v121 = vld [vmem:[#allocation2 + $0x58] sm:$0xff]
    %v122 = vld [vmem:[#allocation2 + $0x60] sm:$0xff]
    %v123 = vld [vmem:[#allocation2 + $0x68] sm:$0xff]
    %v124 = vld [vmem:[#allocation2 + $0x70] sm:$0xff]
    %v125 = vld [vmem:[#allocation2 + $0x78] sm:$0xff]
    %v126 = vld [vmem:[#allocation2 + $0x80] sm:$0xff]
    %v127 = vld [vmem:[#allocation2 + $0x4] sm:$0x1]
    %v128 = vlaneseq
    %v129 = vshrl.u32 %v128, 7
    %v130 = vsub.s32 0, %v129
    %v131 = vrot.slane %v127, %v130
    %132 = vmatprep.subr.mxu0 0.0
    %133 = vmatpush1.msra.mxu0 %v111
    %134 = vmatprep.subr.mxu0 0.0
    %135 = vmatpush1.msra.mxu0 %v112
    %136 = vmatprep.subr.mxu0 0.0
    %137 = vmatpush1.msra.mxu0 %v113
    %138 = vmatprep.subr.mxu0 0.0
    %139 = vmatpush1.msra.mxu0 %v114
    %140 = vmatprep.subr.mxu0 0.0
    %141 = vmatpush1.msra.mxu0 %v115
    %142 = vmatprep.subr.mxu0 0.0
    %143 = vmatpush1.msra.mxu0 %v116
    %144 = vmatprep.subr.mxu0 0.0
    %145 = vmatpush1.msra.mxu0 %v117
    %146 = vmatprep.subr.mxu0 0.0
    %147 = vmatpush1.msra.mxu0 %v118
    %148 = vmatprep.subr.mxu0 0.0
    %149 = vmatpush1.msra.mxu0 %v119
    %150 = vmatprep.subr.mxu0 0.0
    %151 = vmatpush1.msra.mxu0 %v120
    %152 = vmatprep.subr.mxu0 0.0
    %153 = vmatpush1.msra.mxu0 %v121
    %154 = vmatprep.subr.mxu0 0.0
    %155 = vmatpush1.msra.mxu0 %v122
    %156 = vmatprep.subr.mxu0 0.0
    %157 = vmatpush1.msra.mxu0 %v123
    %158 = vmatprep.subr.mxu0 0.0
    %159 = vmatpush1.msra.mxu0 %v124
    %160 = vmatprep.subr.mxu0 0.0
    %161 = vmatpush1.msra.mxu0 %v125
    %162 = vmatprep.subr.mxu0 0.0
    %163 = vmatpush1.msra.mxu0 %v126
    %164 = vmatprep.subr.mxu0 0.0
    %165 = vmatpush1.msra.mxu0 0.0
    %166 = vmatprep.subr.mxu0 0.0
    %167 = vmatpush1.msra.mxu0 0.0
    %168 = vmatprep.subr.mxu0 0.0
    %169 = vmatpush1.msra.mxu0 0.0
    %170 = vmatprep.subr.mxu0 0.0
    %171 = vmatpush1.msra.mxu0 0.0
    %172 = vmatprep.subr.mxu0 0.0
    %173 = vmatpush1.msra.mxu0 0.0
    %174 = vmatprep.subr.mxu0 0.0
    %175 = vmatpush1.msra.mxu0 0.0
    %176 = vmatprep.subr.mxu0 0.0
    %177 = vmatpush1.msra.mxu0 0.0
    %178 = vmatprep.subr.mxu0 0.0
    %179 = vmatpush1.msra.mxu0 0.0
    %180 = vmatprep.subr.mxu0 0.0
    %181 = vmatpush1.msra.mxu0 0.0
    %182 = vmatprep.subr.mxu0 0.0
    %183 = vmatpush1.msra.mxu0 0.0
    %184 = vmatprep.subr.mxu0 0.0
    %185 = vmatpush1.msra.mxu0 0.0
    %186 = vmatprep.subr.mxu0 0.0
    %187 = vmatpush1.msra.mxu0 0.0
    %188 = vmatprep.subr.mxu0 0.0
    %189 = vmatpush1.msra.mxu0 0.0
    %190 = vmatprep.subr.mxu0 0.0
    %191 = vmatpush1.msra.mxu0 0.0
    %192 = vmatprep.subr.mxu0 0.0
    %193 = vmatpush1.msra.mxu0 0.0
    %194 = vmatprep.subr.mxu0 0.0
    %195 = vmatpush1.msra.mxu0 0.0
    %196 = vmatprep.mubr.f32.mxu0 0.0
    %197 = vmatmul.mubr.f32.gmra.mrb[0].mxu0 %v110
    %v198 = vpop.f32.mrb[0].mxu0
    %v199 = vadd.f32 %v131, %v198
    %v200 = vpop.f32.mrb[0].mxu0
    %201 = vdwg.mxu0
    %v202 = vmax.f32 %v199, 0.0
    %vm203 = vcmask 31744
    %204 = vst.msk [vmem:[%s2] sm:$0xff] %vm203, %v202
    // Predicated region
    $region14: #{my_model_forward.1} parent=1 // pred_check
      _
    $region15: #{my_model_forward.1} parent=1 // pred_check_branch
      %206 = sbr.rel (0) target = $region17
    $region16: #{my_model_forward.1} parent=1 // pred_region
      _
    $region17: #{my_model_forward.1} parent=1 // pred_fallthru
      _
    // Predicated region
    $region18: #{my_model_forward.1} parent=1 // pred_check
      _
    $region19: #{my_model_forward.1} parent=1 // pred_check_branch
      %208 = sbr.rel (0) target = $region21
    $region20: #{my_model_forward.1} parent=1 // pred_region
      _
    $region21: #{my_model_forward.1} parent=1 // pred_fallthru
      _
    %209 = vsyncpa [#allocation3], 1

</llo_original>
